<compile_context>
chip_gen: v5e
topology: v5e:2x2
jax: 0.10.0
libtpu: 0.0.40
codegen_flags: <defaults>
</compile_context>

<pallas_src>
import functools

import numpy as np
import jax
import jax.numpy as jnp
from jax.experimental import pallas as pl
from jax.experimental.pallas import tpu as pltpu

LANE = 128        # TPU lane width (last dim)
ROW_ALIGN = 16    # bf16 packs 16 rows per sublane tile -> keep slab block offsets aligned


def _round_up(x, m):
    return ((x + m - 1) // m) * m


# ---------------------------------------------------------------------------
# One-time parameter packing (OFF the per-call hot path).
# All weights and biases are written into one contiguous [rows, 128] bf16 slab
# so the kernel issues exactly two input DMAs (x + slab). Block row offsets are
# aligned to 16 rows (bf16 sublane tiling) so in-kernel slices are cheap views.
# ---------------------------------------------------------------------------
def prepare_params(params, in_dim, out_dim, dtype=jnp.bfloat16):
    hidden = params[:-1]
    w_last = params[-1][0]

    dims = [int(w.shape[1]) for (w, _) in hidden] + [int(out_dim)]
    width = _round_up(max(dims), LANE)

    blocks = []
    hidden_layout = []
    row = 0
    prev = int(in_dim)
    for (w, b) in hidden:
        h = int(w.shape[1])
        w_off = row
        row += _round_up(prev, ROW_ALIGN)
        b_off = row
        row += ROW_ALIGN
        hidden_layout.append((w_off, h, b_off))
        blocks.append((w_off, np.asarray(w, np.float32)))
        blocks.append((b_off, np.asarray(b, np.float32).reshape(1, h)))
        prev = h
    wl_off = row
    row += _round_up(prev, ROW_ALIGN)
    blocks.append((wl_off, np.asarray(w_last, np.float32)))
    total_rows = _round_up(row, ROW_ALIGN)

    slab = np.zeros((total_rows, width), np.float32)
    for off, arr in blocks:
        r, c = arr.shape
        slab[off:off + r, :c] = arr

    # Static (hashable) layout metadata used to carve layers inside the kernel.
    layout = (int(in_dim), tuple(hidden_layout), (wl_off, int(out_dim)))
    return jnp.asarray(slab, dtype=dtype), layout


# ---------------------------------------------------------------------------
# Fused kernel: every layer + log_softmax in one body.
# refs = (x, slab, out). Intermediate activations stay in vregs.
# ---------------------------------------------------------------------------
def _fused_mlp_kernel(x_ref, slab_ref, o_ref, *, layout):
    in_dim, hidden_layout, (wl_off, out_dim) = layout

    h = x_ref[...].astype(jnp.bfloat16)            # [n, in_dim]
    k = in_dim
    for (w_off, h_dim, b_off) in hidden_layout:
        w = slab_ref[w_off:w_off + k, 0:h_dim]      # bf16 [k, h_dim] (static view)
        b = slab_ref[b_off:b_off + 1, 0:h_dim].astype(jnp.float32)   # [1, h_dim]
        y = jnp.dot(h, w, preferred_element_type=jnp.float32) + b
        # dropout == identity in eval mode; then ReLU
        h = jnp.maximum(y, 0.0).astype(jnp.bfloat16)
        k = h_dim

    w_last = slab_ref[wl_off:wl_off + k, 0:out_dim]  # bf16 [k, out_dim]
    logits = jnp.dot(h, w_last, preferred_element_type=jnp.float32)

    # Numerically stable log_softmax over the (exact, unpadded) class axis.
    m = jnp.max(logits, axis=-1, keepdims=True)
    s = logits - m
    lse = jnp.log(jnp.sum(jnp.exp(s), axis=-1, keepdims=True))
    o_ref[...] = (s - lse).astype(o_ref.dtype)


# ---------------------------------------------------------------------------
# Per-call wrapper: no padding, no slicing — one pallas_call only.
# ---------------------------------------------------------------------------
@functools.partial(jax.jit, static_argnames=("layout",))
def mlp_forward(x, slab, layout):
    in_dim, hidden_layout, (_, out_dim) = layout
    n = x.shape[0]

    # Advisory cost estimate so XLA schedules this tiny custom call sensibly.
    flops = 0
    k = in_dim
    for (_, h_dim, _) in hidden_layout:
        flops += 2 * n * k * h_dim
        k = h_dim
    flops += 2 * n * k * out_dim
    transcendentals = n * out_dim + n  # exp per logit + log per row
    bytes_accessed = (x.size * x.dtype.itemsize
                      + slab.size * slab.dtype.itemsize
                      + n * out_dim * 4)

    kernel = functools.partial(_fused_mlp_kernel, layout=layout)
    return pl.pallas_call(
        kernel,
        out_shape=jax.ShapeDtypeStruct((n, out_dim), jnp.float32),
        in_specs=[pl.BlockSpec(memory_space=pltpu.MemorySpace.VMEM),
                  pl.BlockSpec(memory_space=pltpu.MemorySpace.VMEM)],
        out_specs=pl.BlockSpec(memory_space=pltpu.MemorySpace.VMEM),
        cost_estimate=pl.CostEstimate(flops=flops,
                                      transcendentals=transcendentals,
                                      bytes_accessed=bytes_accessed),
    )(x, slab)


# ---------------------------------------------------------------------------
# Parameter construction (weights stored [in_dim, out_dim]; biases [1, out_dim])
# ---------------------------------------------------------------------------
def init_mlp_params(key, in_dim, out_dim, hiddens):
    params = []
    prev = in_dim
    dims = list(hiddens) + [out_dim]
    for i, d in enumerate(dims):
        key, kw, kb = jax.random.split(key, 3)
        bound = float(prev) ** -0.5
        w = jax.random.uniform(kw, (prev, d), jnp.float32, -bound, bound)
        if i < len(dims) - 1:  # hidden layers have bias; last layer bias=False
            b = jax.random.uniform(kb, (1, d), jnp.float32, -bound, bound)
        else:
            b = None
        params.append((w, b))
        prev = d
    return params


def mlp_reference_f32(x, params):
    h = x
    for (w, b) in params[:-1]:
        h = jnp.maximum(h @ w + b, 0.0)
    logits = h @ params[-1][0]
    return jax.nn.log_softmax(logits, axis=-1)


def mlp_reference_bf16(x, params):
    """Mirrors the kernel numerics: bf16 operands, f32 accumulation."""
    h = x
    for (w, b) in params[:-1]:
        y = jnp.dot(h.astype(jnp.bfloat16), w.astype(jnp.bfloat16),
                    preferred_element_type=jnp.float32)
        h = jnp.maximum(y + b.astype(jnp.bfloat16).astype(jnp.float32), 0.0)
    logits = jnp.dot(h.astype(jnp.bfloat16), params[-1][0].astype(jnp.bfloat16),
                     preferred_element_type=jnp.float32)
    return jax.nn.log_softmax(logits, axis=-1)


# ---------------------------------------------------------------------------
if __name__ == "__main__":
    # Small shapes consistent with the module: MLP(in_dim=32, out_dim=16, hiddens=[64, 48])
    in_dim, out_dim = 32, 16
    hiddens = [64, 48]
    batch = 8

    key = jax.random.PRNGKey(0)
    key, kx = jax.random.split(key)
    x = jax.random.normal(kx, (batch, in_dim), jnp.float32)

    params = init_mlp_params(key, in_dim, out_dim, hiddens)
    # Pack/pad parameters ONCE, off the per-call path.
    slab, layout = prepare_params(params, in_dim, out_dim)

    out = mlp_forward(x, slab, layout)
    out = jax.block_until_ready(out)

    # Correctness checks.
    assert out.shape == (batch, out_dim)
    ref16 = mlp_reference_bf16(x, params)        # same quantization as the kernel
    assert bool(jnp.all(jnp.abs(out - ref16) < 2e-3)), float(jnp.max(jnp.abs(out - ref16)))
    ref32 = mlp_reference_f32(x, params)         # original f32 module semantics
    assert bool(jnp.all(jnp.abs(out - ref32) < 5e-2)), float(jnp.max(jnp.abs(out - ref32)))
    row_sums = jnp.sum(jnp.exp(out), axis=-1)
    assert bool(jnp.all(jnp.abs(row_sums - 1.0) < 1e-3))

    print("KERNEL_OK")
</pallas_src>

<mosaic_0001>
module attributes {stable_mosaic.version = 11 : i64} {
  func.func @_fused_mlp_kernel(%arg0: memref<8x32xf32, #tpu.memory_space<vmem>>, %arg1: memref<176x128xbf16, #tpu.memory_space<vmem>>, %arg2: memref<8x16xf32, #tpu.memory_space<vmem>>) attributes {dimension_semantics = [], scalar_prefetch = 0 : i64, scratch_operands = 0 : i64, tpu.core_type = #tpu.core_type<tc>} {
    %c0 = arith.constant 0 : index
    %c0_0 = arith.constant 0 : index
    %0 = vector.load %arg0[%c0, %c0_0] : memref<8x32xf32, #tpu.memory_space<vmem>>, vector<8x32xf32>
    %1 = arith.truncf %0 : vector<8x32xf32> to vector<8x32xbf16>
    %c0_1 = arith.constant 0 : index
    %c0_2 = arith.constant 0 : index
    %2 = vector.load %arg1[%c0_1, %c0_2] : memref<176x128xbf16, #tpu.memory_space<vmem>>, vector<32x64xbf16>
    %c32 = arith.constant 32 : index
    %c0_3 = arith.constant 0 : index
    %3 = vector.load %arg1[%c32, %c0_3] : memref<176x128xbf16, #tpu.memory_space<vmem>>, vector<1x64xbf16>
    %4 = arith.extf %3 : vector<1x64xbf16> to vector<1x64xf32>
    %cst = arith.constant dense<0.000000e+00> : vector<8x64xf32>
    %5 = tpu.matmul %1, %2, %cst {dimension_numbers = #tpu.dot_dimension_numbers<[1], [0], [0], [1], [0, 0, 1, 1], [], []>} : vector<8x32xbf16>, vector<32x64xbf16>, vector<8x64xf32> -> vector<8x64xf32>
    %6 = vector.broadcast %4 : vector<1x64xf32> to vector<8x64xf32>
    %7 = arith.addf %5, %6 : vector<8x64xf32>
    %cst_4 = arith.constant 0.000000e+00 : f32
    %8 = vector.broadcast %cst_4 : f32 to vector<8x64xf32>
    %9 = arith.maximumf %7, %8 : vector<8x64xf32>
    %10 = arith.truncf %9 : vector<8x64xf32> to vector<8x64xbf16>
    %c48 = arith.constant 48 : index
    %c0_5 = arith.constant 0 : index
    %11 = vector.load %arg1[%c48, %c0_5] : memref<176x128xbf16, #tpu.memory_space<vmem>>, vector<64x48xbf16>
    %c112 = arith.constant 112 : index
    %c0_6 = arith.constant 0 : index
    %12 = vector.load %arg1[%c112, %c0_6] : memref<176x128xbf16, #tpu.memory_space<vmem>>, vector<1x48xbf16>
    %13 = arith.extf %12 : vector<1x48xbf16> to vector<1x48xf32>
    %cst_7 = arith.constant dense<0.000000e+00> : vector<8x48xf32>
    %14 = tpu.matmul %10, %11, %cst_7 {dimension_numbers = #tpu.dot_dimension_numbers<[1], [0], [0], [1], [0, 0, 1, 1], [], []>} : vector<8x64xbf16>, vector<64x48xbf16>, vector<8x48xf32> -> vector<8x48xf32>
    %15 = vector.broadcast %13 : vector<1x48xf32> to vector<8x48xf32>
    %16 = arith.addf %14, %15 : vector<8x48xf32>
    %cst_8 = arith.constant 0.000000e+00 : f32
    %17 = vector.broadcast %cst_8 : f32 to vector<8x48xf32>
    %18 = arith.maximumf %16, %17 : vector<8x48xf32>
    %19 = arith.truncf %18 : vector<8x48xf32> to vector<8x48xbf16>
    %c128 = arith.constant 128 : index
    %c0_9 = arith.constant 0 : index
    %20 = vector.load %arg1[%c128, %c0_9] : memref<176x128xbf16, #tpu.memory_space<vmem>>, vector<48x16xbf16>
    %cst_10 = arith.constant dense<0.000000e+00> : vector<8x16xf32>
    %21 = tpu.matmul %19, %20, %cst_10 {dimension_numbers = #tpu.dot_dimension_numbers<[1], [0], [0], [1], [0, 0, 1, 1], [], []>} : vector<8x48xbf16>, vector<48x16xbf16>, vector<8x16xf32> -> vector<8x16xf32>
    %cst_11 = arith.constant dense<0xFF800000> : vector<8xf32>
    %22 = vector.multi_reduction <maximumf>, %21, %cst_11 [1] : vector<8x16xf32> to vector<8xf32>
    %23 = vector.shape_cast %22 : vector<8xf32> to vector<8x1xf32>
    %24 = vector.broadcast %23 : vector<8x1xf32> to vector<8x16xf32>
    %25 = arith.subf %21, %24 : vector<8x16xf32>
    %26 = math.exp %25 : vector<8x16xf32>
    %cst_12 = arith.constant dense<0.000000e+00> : vector<8xf32>
    %27 = vector.multi_reduction <add>, %26, %cst_12 [1] : vector<8x16xf32> to vector<8xf32>
    %28 = vector.shape_cast %27 : vector<8xf32> to vector<8x1xf32>
    %29 = math.log %28 : vector<8x1xf32>
    %30 = vector.broadcast %29 : vector<8x1xf32> to vector<8x16xf32>
    %31 = arith.subf %25, %30 : vector<8x16xf32>
    %c0_13 = arith.constant 0 : index
    %c0_14 = arith.constant 0 : index
    %32 = vector.load %arg2[%c0_13, %c0_14] : memref<8x16xf32, #tpu.memory_space<vmem>>, vector<8x16xf32>
    tpu.vector_store %arg2[%c0_13, %c0_14], %31 {strides = array<i32>} : memref<8x16xf32, #tpu.memory_space<vmem>>, vector<8x16xf32>,
    return
  }
}

</mosaic_0001>

<llo_original>
// kernel: mlp_forward.1
$region0: #{mlp_forward.1}
  #allocation0 [shape = 'u32[]', space=smem, size = 0x4, offset = 0x4, fixed_abs, tag = 'smem constant byte address 0x4 - core index']
  #allocation1 [shape = 'u32[72,128]{1,0:T(1,128)}', space=vmem, size = 0x9000, scoped, tag = 'internal scratch']
  %s0 = inlined_call_operand.hbm [shape: f32[8,32], index: 0, kind: input, shape index: {}]
  %s1 = inlined_call_operand.hbm [shape: bf16[176,128], index: 1, kind: input, shape index: {}]
  %s2 = inlined_call_operand.hbm [shape: f32[8,16], index: 2, kind: output, shape index: {}]
  %s3 = sld [smem:[#allocation0]]
  $region26: #{mlp_forward.1} parent=0
    _
  %s5 = ssub.s32 1, %s3
  %s6 = scalar_select 0, %s5, %s3
  $region1: #{mlp_forward.1} parent=0
    #allocation2 [shape = 'u8[4096]{0}', space=vmem, size = 0x1000, scoped, tag = 'input window, operand 0, single buffered']
    #allocation3 [shape = 's32[1]{0}', space=sflag, size = 0x4, scoped, tag = 'scoped memory for mlp_forward.1']
    #allocation4 [shape = 's32[1]{0}', space=sflag, size = 0x4, scoped, tag = 'scoped memory for mlp_forward.1']
    #allocation5 [shape = 'u8[45056]{0}', space=vmem, size = 0xb000, scoped, tag = 'input window, operand 1, single buffered']
    #allocation6 [shape = 's32[1]{0}', space=sflag, size = 0x4, scoped, tag = 'scoped memory for mlp_forward.1']
    #allocation7 [shape = 'u8[4096]{0}', space=vmem, size = 0x1000, scoped, tag = 'output window, operand 0, single buffered']
    %7 = vsyncpa [#allocation3], 0
    %8 = vsyncpa [#allocation6], 0
    %9 = vsyncpa [#allocation4], 0
    // Predicated region
    $region2: #{mlp_forward.1} parent=1 // pred_check
      _
    $region3: #{mlp_forward.1} parent=1 // pred_check_branch
      %11 = sbr.rel (0) target = $region5
    $region4: #{mlp_forward.1} parent=1 // pred_region
      %13 = vsyncadd [#allocation3], 0
      %s15 = sshll.u32 %s0, 4
      %s16 = int_to_ptr.hbm [resolvable:$true] %s15
      %s17 = sshll.u32 [#allocation2], 4
      %s18 = int_to_ptr.vmem [resolvable:$true] %s17
      %20 = dma.hbm_to_vmem [thread:$0]  %s16, 128, %s18, [#allocation3]
    $region5: #{mlp_forward.1} parent=1 // pred_fallthru
      _
    // Predicated region
    $region6: #{mlp_forward.1} parent=1 // pred_check
      _
    $region7: #{mlp_forward.1} parent=1 // pred_check_branch
      %22 = sbr.rel (0) target = $region9
    $region8: #{mlp_forward.1} parent=1 // pred_region
      %24 = vsyncadd [#allocation6], 0
      %s25 = sshll.u32 %s1, 4
      %s26 = int_to_ptr.hbm [resolvable:$true] %s25
      %s27 = sshll.u32 [#allocation5], 4
      %s28 = int_to_ptr.vmem [resolvable:$true] %s27
      %33 = dma.hbm_to_vmem [thread:$0]  %s26, 1408, %s28, [#allocation6], 64, 64, 4
    $region9: #{mlp_forward.1} parent=1 // pred_fallthru
      _
    // Predicated region
    $region10: #{mlp_forward.1} parent=1 // pred_check
      _
    $region11: #{mlp_forward.1} parent=1 // pred_check_branch
      %35 = sbr.rel (0) target = $region13
    $region12: #{mlp_forward.1} parent=1 // pred_region
      %37 = dma.done [#allocation3], 128
    $region13: #{mlp_forward.1} parent=1 // pred_fallthru
      _
    // Predicated region
    $region14: #{mlp_forward.1} parent=1 // pred_check
      _
    $region15: #{mlp_forward.1} parent=1 // pred_check_branch
      %39 = sbr.rel (0) target = $region17
    $region16: #{mlp_forward.1} parent=1 // pred_region
      %41 = dma.done [#allocation6], 1408
    $region17: #{mlp_forward.1} parent=1 // pred_fallthru
      _
    %v43 = vld [vmem:[#allocation2] sm:$0xff]
    %v44 = vpack.c.bf16 %v43, %v43
    %v45 = vld [vmem:[#allocation5] sm:$0xf]
    %v46 = vld [vmem:[#allocation5 + $0x4] sm:$0xf]
    %v47 = vld [vmem:[#allocation5 + $0x8] sm:$0xf]
    %v48 = vld [vmem:[#allocation5 + $0xc] sm:$0xf]
    %v49 = vld [vmem:[#allocation5 + $0x10] sm:$0x1]
    %v50 = vunpack.c.l.bf16 %v49
    %v51 = vperm.slane %v50, 0
    %v56 = vunpack.c.l.b16 %v45
    %v57 = vunpack.c.l.b16 %v46
    %v58 = vunpack.c.l.b16 %v47
    %v59 = vunpack.c.l.b16 %v48
    %v60 = vpack.c.b16 %v57, %v56
    %v61 = vpack.c.b16 %v59, %v58
    %vm64 = vcmask 261120
    %v66 = vsel %vm64, %v44, 0
    %68 = vmatpush.bf16.msra.mxu0 0
    %69 = vmatpush.bf16.msra.mxu0 0
    %70 = vmatpush.bf16.msra.mxu0 0
    %71 = vmatpush.bf16.msra.mxu0 0
    %72 = vmatpush.bf16.msra.mxu0 0
    %73 = vmatpush.bf16.msra.mxu0 0
    %74 = vmatpush.bf16.msra.mxu0 %v61
    %75 = vmatpush.bf16.msra.mxu0 %v60
    %76 = vmatmul.bf16.gmra.mxu0 %v66
    %v77 = vpop.f32.mrf.mxu0
    %v78 = vadd.f32 %v51, %v77
    %v79 = vpop.f32.mrf.mxu0
    %80 = vdwg.mxu0
    %v81 = vmax.f32 %v78, 0.0
    %v82 = vpack.c.bf16 %v81, %v81
    %v83 = vld [vmem:[#allocation5 + $0x18] sm:$0xf]
    %v84 = vld [vmem:[#allocation5 + $0x1c] sm:$0xf]
    %v85 = vld [vmem:[#allocation5 + $0x20] sm:$0xf]
    %v86 = vld [vmem:[#allocation5 + $0x24] sm:$0xf]
    %v87 = vld [vmem:[#allocation5 + $0x28] sm:$0xf]
    %v88 = vld [vmem:[#allocation5 + $0x2c] sm:$0xf]
    %v89 = vld [vmem:[#allocation5 + $0x30] sm:$0xf]
    %v90 = vld [vmem:[#allocation5 + $0x34] sm:$0xf]
    %v91 = vld [vmem:[#allocation5 + $0x38] sm:$0x1]
    %v92 = vunpack.c.l.bf16 %v91
    %v93 = vperm.slane %v92, 0
    %v102 = vunpack.c.l.b16 %v83
    %v103 = vunpack.c.l.b16 %v84
    %v104 = vunpack.c.l.b16 %v85
    %v105 = vunpack.c.l.b16 %v86
    %v106 = vunpack.c.l.b16 %v87
    %v107 = vunpack.c.l.b16 %v88
    %v108 = vunpack.c.l.b16 %v89
    %v109 = vunpack.c.l.b16 %v90
    %v110 = vpack.c.b16 %v103, %v102
    %v111 = vpack.c.b16 %v105, %v104
    %v112 = vpack.c.b16 %v107, %v106
    %v113 = vpack.c.b16 %v109, %v108
    %vm118 = vcmask 523264
    %v120 = vsel %vm118, %v82, 0
    %122 = vmatpush.bf16.msra.mxu0 0
    %123 = vmatpush.bf16.msra.mxu0 0
    %124 = vmatpush.bf16.msra.mxu0 0
    %125 = vmatpush.bf16.msra.mxu0 0
    %126 = vmatpush.bf16.msra.mxu0 %v113
    %127 = vmatpush.bf16.msra.mxu0 %v112
    %128 = vmatpush.bf16.msra.mxu0 %v111
    %129 = vmatpush.bf16.msra.mxu0 %v110
    %130 = vmatmul.bf16.gmra.mxu0 %v120
    %v131 = vpop.f32.mrf.mxu0
    %v132 = vadd.f32 %v93, %v131
    %v133 = vpop.f32.mrf.mxu0
    %134 = vdwg.mxu0
    %v135 = vmax.f32 %v132, 0.0
    %v136 = vpack.c.bf16 %v135, %v135
    %v137 = vld [vmem:[#allocation5 + $0x40] sm:$0xf]
    %v138 = vld [vmem:[#allocation5 + $0x44] sm:$0xf]
    %v139 = vld [vmem:[#allocation5 + $0x48] sm:$0xf]
    %v140 = vld [vmem:[#allocation5 + $0x4c] sm:$0xf]
    %v141 = vld [vmem:[#allocation5 + $0x50] sm:$0xf]
    %v142 = vld [vmem:[#allocation5 + $0x54] sm:$0xf]
    %v149 = vunpack.c.l.b16 %v137
    %v150 = vunpack.c.l.b16 %v138
    %v151 = vunpack.c.l.b16 %v139
    %v152 = vunpack.c.l.b16 %v140
    %v153 = vunpack.c.l.b16 %v141
    %v154 = vunpack.c.l.b16 %v142
    %v155 = vpack.c.b16 %v150, %v149
    %v156 = vpack.c.b16 %v152, %v151
    %v157 = vpack.c.b16 %v154, %v153
    %vm161 = vcmask 392192
    %v163 = vsel %vm161, %v136, 0
    %165 = vmatpush.bf16.msra.mxu0 0
    %166 = vmatpush.bf16.msra.mxu0 0
    %167 = vmatpush.bf16.msra.mxu0 0
    %168 = vmatpush.bf16.msra.mxu0 0
    %169 = vmatpush.bf16.msra.mxu0 0
    %170 = vmatpush.bf16.msra.mxu0 %v157
    %171 = vmatpush.bf16.msra.mxu0 %v156
    %172 = vmatpush.bf16.msra.mxu0 %v155
    %173 = vmatmul.bf16.gmra.mxu0 %v163
    %v174 = vpop.f32.mrf.mxu0
    %v175 = vadd.f32 0.0, %v174
    %v176 = vpop.f32.mrf.mxu0
    %177 = vdwg.mxu0
    %vm178 = vcmask 130048
    %v179 = vsel %vm178, %v175, -inf
    %180 = vmax.xlane.f32.xlu0 %v179
    %v181 = vpop.xlane.xlu0 %180
    %v182 = vsub.f32 %v175, %v181
    %v183 = vmul.f32 %v182, 1.442695
    %v184 = vpow.pop %v183
    %v185 = vsel %vm178, %v184, 0.0
    %186 = vadd.xlane.f32.xlu0 %v185
    %v187 = vpop.xlane.xlu0 %186
    %v188 = vlog2.pop %v187
    %v189 = vmul.f32 %v188, 0.6931472
    %v190 = vsub.f32 %v182, %v189
    %191 = vst.msk [vmem:[#allocation7] sm:$0xff] %vm178, %v190
    // Predicated region
    $region18: #{mlp_forward.1} parent=1 // pred_check
      _
    $region19: #{mlp_forward.1} parent=1 // pred_check_branch
      %193 = sbr.rel (0) target = $region21
    $region20: #{mlp_forward.1} parent=1 // pred_region
      %195 = vsyncadd [#allocation4], 0
      %s197 = sshll.u32 [#allocation7], 4
      %s198 = int_to_ptr.vmem [resolvable:$true] %s197
      %s199 = sshll.u32 %s2, 4
      %s200 = int_to_ptr.hbm [resolvable:$true] %s199
      %202 = dma.vmem_to_hbm [thread:$0]  %s198, 128, %s200, [#allocation4]
    $region21: #{mlp_forward.1} parent=1 // pred_fallthru
      _
    // Predicated region
    $region22: #{mlp_forward.1} parent=1 // pred_check
      _
    $region23: #{mlp_forward.1} parent=1 // pred_check_branch
      %204 = sbr.rel (0) target = $region25
    $region24: #{mlp_forward.1} parent=1 // pred_region
      %206 = dma.done [#allocation4], 128
    $region25: #{mlp_forward.1} parent=1 // pred_fallthru
      _
    %207 = vsyncpa [#allocation3], 1
    %208 = vsyncpa [#allocation6], 1
    %209 = vsyncpa [#allocation4], 1

</llo_original>
